<compile_context>
chip_gen: v7x
topology: tpu7x:2x2x1
jax: 0.10.0
libtpu: 0.0.40
codegen_flags: <defaults>
</compile_context>

<pallas_src>
import functools
import math

import jax
import jax.numpy as jnp
from jax.experimental import pallas as pl
from jax.experimental.pallas import tpu as pltpu


_LANE = 128  # lane width (last-dim alignment)


def _round_up(v, m):
    return ((v + m - 1) // m) * m


def _gelu_exact(x):
    # PyTorch nn.GELU() default (approximate='none'): 0.5 * x * (1 + erf(x / sqrt(2)))
    return 0.5 * x * (1.0 + jax.lax.erf(x * (1.0 / math.sqrt(2.0))))


def mlp_kernel(x_ref, w1_ref, b1_ref, w2_ref, b2_ref, o_ref, acc_ref, *,
               precision, approximate_gelu):
    # x_ref : (tm, Dp)   row tile of tokens (resident across the H grid axis)
    # w1_ref: (Dp, th)   streamed column chunk of W1
    # b1_ref: (1, th)    matching chunk of b1
    # w2_ref: (th, Dp)   streamed row chunk of W2
    # b2_ref: (1, Dp)    full b2 (constant block)
    # o_ref : (tm, Dp)   output tile (resident across H; written on last H step)
    # acc_ref: (tm, Dp)  f32 accumulator scratch
    h_idx = pl.program_id(1)

    @pl.when(h_idx == 0)
    def _():
        acc_ref[...] = jnp.zeros_like(acc_ref)

    # fc1 chunk on the MXU: (tm, Dp) @ (Dp, th) -> (tm, th), f32 accumulation.
    h = jnp.dot(x_ref[...], w1_ref[...],
                preferred_element_type=jnp.float32, precision=precision)
    h = h + b1_ref[...].astype(jnp.float32)          # broadcast (1, th) over rows

    if approximate_gelu:
        # tanh-GELU routes the transcendental to the EUP slot (cheap on v6e/v7x);
        # numerics deviate slightly from nn.GELU(approximate='none').
        h = jax.nn.gelu(h, approximate=True)
    else:
        h = _gelu_exact(h)                           # matches nn.GELU() default

    # Dropout: identity in eval mode.
    # TODO(synk): train-mode dropout via pltpu.prng_seed(seed + program_id) +
    #             pltpu.prng_random_bits, seeded per grid step.

    # fc2 chunk: (tm, th) @ (th, Dp), accumulated over the H grid axis in f32.
    h = h.astype(w2_ref.dtype)
    acc_ref[...] += jnp.dot(h, w2_ref[...],
                            preferred_element_type=jnp.float32, precision=precision)

    @pl.when(h_idx == pl.num_programs(1) - 1)
    def _():
        o_ref[...] = (acc_ref[...] + b2_ref[...].astype(jnp.float32)).astype(o_ref.dtype)


def _vmem_capacity_bytes():
    """Per-core VMEM capacity; falls back to the most conservative value (v7x: 64 MiB),
    which can only under-use VMEM, never OOM it."""
    try:
        return int(pltpu.get_tpu_info().vmem_capacity_bytes)
    except Exception:
        return 64 * 1024 * 1024


def _estimate_vmem_bytes(tm, th, Dp, itemsize):
    streamed = 2 * (Dp * th + th * Dp + th) * itemsize   # double-buffered w1 / w2 / b1 chunks
    act = 2 * (2 * tm * Dp) * itemsize                   # double-buffered x tile + out tile
    acc = tm * Dp * 4                                    # f32 accumulator scratch
    hidden = 2 * tm * th * 4                             # f32 hidden chunk + GELU temporaries
    bias2 = 2 * Dp * itemsize
    return streamed + act + acc + hidden + bias2


def _largest_dividing_tile(total, cap):
    """Largest multiple of 128 that divides `total` (a multiple of 128) and is <= cap."""
    cap = max(_LANE, (cap // _LANE) * _LANE)
    t = cap
    while t > _LANE and total % t != 0:
        t -= _LANE
    return t


def _select_tiles(M, Dp, Hp, itemsize, vmem_cap, tm_max, th_max):
    """Pick (tm, th): biggest row tile / H chunk that fit ~half of this chip's VMEM."""
    sublane = {4: 8, 2: 16, 1: 32}.get(itemsize, 8)
    budget = max(int(0.5 * vmem_cap), 8 << 20)
    tm = max(sublane, min(_round_up(tm_max, sublane), _round_up(M, sublane)))
    while True:
        th = _largest_dividing_tile(Hp, min(th_max, Hp))
        while th > _LANE and _estimate_vmem_bytes(tm, th, Dp, itemsize) > budget:
            th = _largest_dividing_tile(Hp, th - _LANE)
        if _estimate_vmem_bytes(tm, th, Dp, itemsize) <= budget or tm <= sublane:
            return tm, th
        tm = max(sublane, ((tm // 2) // sublane) * sublane)


def prepare_mlp_params(w1, b1, w2, b2):
    """Pad parameters ONCE at model init so feature dims are lane-dense (multiples of 128).
    w1: (n_embd, n_inner), b1: (n_inner,), w2: (n_inner, n_embd), b2: (n_embd,).
    Returns (padded params, (n_embd, n_inner))."""
    D, H = w1.shape
    Dp = _round_up(max(D, _LANE), _LANE)
    Hp = _round_up(max(H, _LANE), _LANE)
    w1p = jnp.pad(w1, ((0, Dp - D), (0, Hp - H)))
    b1p = jnp.pad(b1, (0, Hp - H)).reshape(1, Hp)
    w2p = jnp.pad(w2, ((0, Hp - H), (0, Dp - D)))
    b2p = jnp.pad(b2, (0, Dp - D)).reshape(1, Dp)
    return (w1p, b1p, w2p, b2p), (D, H)


def mlp_forward(x, params, dims, *, tm_max=256, th_max=2048,
                precision=None, approximate_gelu=False):
    """x: (M, n_embd); params from prepare_mlp_params.  Returns (M, n_embd).

    precision: None -> default (bf16-class MXU passes, fast; matches jnp default).
               Pass jax.lax.Precision.HIGHEST for exact f32 matmuls at large K.
    """
    w1p, b1p, w2p, b2p = params
    D, _ = dims
    M = x.shape[0]
    Dp, Hp = w1p.shape

    itemsize = jnp.dtype(x.dtype).itemsize
    vmem_cap = _vmem_capacity_bytes()
    tm, th = _select_tiles(M, Dp, Hp, itemsize, vmem_cap, tm_max, th_max)

    # Only the feature axis is padded (and only when D % 128 != 0); M stays ragged —
    # Pallas masks the out-of-bounds rows of the final block, and rows are independent.
    xp = x if Dp == D else jnp.pad(x, ((0, 0), (0, Dp - D)))

    est = _estimate_vmem_bytes(tm, th, Dp, itemsize)
    vmem_limit = int(min(0.9 * vmem_cap, max(2 * est, 32 * 1024 * 1024)))

    grid = (pl.cdiv(M, tm), Hp // th)

    kernel = functools.partial(mlp_kernel, precision=precision,
                               approximate_gelu=approximate_gelu)

    out = pl.pallas_call(
        kernel,
        out_shape=jax.ShapeDtypeStruct((M, Dp), x.dtype),
        grid_spec=pltpu.PrefetchScalarGridSpec(
            num_scalar_prefetch=0,
            grid=grid,
            in_specs=[
                pl.BlockSpec((tm, Dp), lambda i, h: (i, 0)),   # x row tile (resident over H)
                pl.BlockSpec((Dp, th), lambda i, h: (0, h)),   # W1 chunk (streamed, 2-buffered)
                pl.BlockSpec((1, th), lambda i, h: (0, h)),    # b1 chunk
                pl.BlockSpec((th, Dp), lambda i, h: (h, 0)),   # W2 chunk (streamed, 2-buffered)
                pl.BlockSpec((1, Dp), lambda i, h: (0, 0)),    # b2 (constant)
            ],
            out_specs=pl.BlockSpec((tm, Dp), lambda i, h: (i, 0)),
            scratch_shapes=[pltpu.VMEM((tm, Dp), jnp.float32)],
        ),
        compiler_params=pltpu.CompilerParams(
            dimension_semantics=("parallel", "arbitrary"),
            vmem_limit_bytes=vmem_limit,
        ),
    )(xp, w1p, b1p, w2p, b2p)

    return out if Dp == D else out[:, :D]


def reference_mlp(x, w1, b1, w2, b2):
    h = jax.nn.gelu(x @ w1 + b1, approximate=False)
    return h @ w2 + b2


if __name__ == "__main__":
    # Small config consistent with the module: n_embd=32, n_inner=128, dropout (eval -> identity)
    batch, seq, n_embd, n_inner = 2, 8, 32, 128

    key = jax.random.PRNGKey(0)
    kx, k1, k2, k3, k4 = jax.random.split(key, 5)

    x = jax.random.normal(kx, (batch, seq, n_embd), dtype=jnp.float32)

    # Deterministic parameter init (uniform, torch-Linear-like scale), stored as (in, out).
    bound1 = 1.0 / math.sqrt(n_embd)
    bound2 = 1.0 / math.sqrt(n_inner)
    w1 = jax.random.uniform(k1, (n_embd, n_inner), jnp.float32, -bound1, bound1)
    b1 = jax.random.uniform(k2, (n_inner,), jnp.float32, -bound1, bound1)
    w2 = jax.random.uniform(k3, (n_inner, n_embd), jnp.float32, -bound2, bound2)
    b2 = jax.random.uniform(k4, (n_embd,), jnp.float32, -bound2, bound2)

    # Pad weights ONCE at init (hoisted out of the per-call path).
    params, dims = prepare_mlp_params(w1, b1, w2, b2)

    # Jit the wrapper so the (rare) activation feature-pad / slice fuse into the call.
    fwd = jax.jit(lambda xx, *ps: mlp_forward(xx, ps, dims))

    x2d = x.reshape(batch * seq, n_embd)
    out2d = fwd(x2d, *params)
    out = out2d.reshape(batch, seq, n_embd)
    jax.block_until_ready(out)

    ref = reference_mlp(x2d, w1, b1, w2, b2).reshape(batch, seq, n_embd)
    assert jnp.allclose(out, ref, atol=1e-5, rtol=1e-5), "mismatch vs reference"

    print("KERNEL_OK")
</pallas_src>

<mosaic_0001>
module attributes {stable_mosaic.version = 11 : i64} {
  func.func @mlp_kernel(%arg0: i32, %arg1: i32, %arg2: memref<16x128xf32, #tpu.memory_space<vmem>>, %arg3: memref<128x128xf32, #tpu.memory_space<vmem>>, %arg4: memref<1x128xf32, #tpu.memory_space<vmem>>, %arg5: memref<128x128xf32, #tpu.memory_space<vmem>>, %arg6: memref<1x128xf32, #tpu.memory_space<vmem>>, %arg7: memref<16x128xf32, #tpu.memory_space<vmem>>, %arg8: memref<16x128xf32, #tpu.memory_space<vmem>>) attributes {dimension_semantics = [#tpu.dimension_semantics<parallel>, #tpu.dimension_semantics<arbitrary>], iteration_bounds = array<i64: 1, 1>, scalar_prefetch = 0 : i64, scratch_operands = 1 : i64, tpu.core_type = #tpu.core_type<tc>, window_params = [{transform_indices = @transform_0, window_bounds = array<i64: 16, 128>}, {transform_indices = @transform_1, window_bounds = array<i64: 128, 128>}, {transform_indices = @transform_2, window_bounds = array<i64: 1, 128>}, {transform_indices = @transform_3, window_bounds = array<i64: 128, 128>}, {pipeline_mode = #tpu.pipeline_mode<synchronous>, transform_indices = @transform_4, window_bounds = array<i64: 1, 128>}, {transform_indices = @transform_5, window_bounds = array<i64: 16, 128>}]} {
    %c0_i32 = arith.constant 0 : i32
    %0 = arith.cmpi eq, %arg1, %c0_i32 : i32
    %1 = arith.extui %0 : i1 to i32
    %c0_i32_0 = arith.constant 0 : i32
    %2 = arith.cmpi ne, %1, %c0_i32_0 : i32
    scf.if %2 {
      %cst_18 = arith.constant 0.000000e+00 : f32
      %25 = vector.broadcast %cst_18 : f32 to vector<16x128xf32>
      %c0_19 = arith.constant 0 : index
      %c0_20 = arith.constant 0 : index
      %26 = vector.load %arg8[%c0_19, %c0_20] : memref<16x128xf32, #tpu.memory_space<vmem>>, vector<16x128xf32>
      tpu.vector_store %arg8[%c0_19, %c0_20], %25 {strides = array<i32>} : memref<16x128xf32, #tpu.memory_space<vmem>>, vector<16x128xf32>,
    } else {
    }
    %c0 = arith.constant 0 : index
    %c0_1 = arith.constant 0 : index
    %3 = vector.load %arg2[%c0, %c0_1] : memref<16x128xf32, #tpu.memory_space<vmem>>, vector<16x128xf32>
    %c0_2 = arith.constant 0 : index
    %c0_3 = arith.constant 0 : index
    %4 = vector.load %arg3[%c0_2, %c0_3] : memref<128x128xf32, #tpu.memory_space<vmem>>, vector<128x128xf32>
    %cst = arith.constant dense<0.000000e+00> : vector<16x128xf32>
    %5 = tpu.matmul %3, %4, %cst {dimension_numbers = #tpu.dot_dimension_numbers<[1], [0], [0], [1], [0, 0, 1, 1], [], []>} : vector<16x128xf32>, vector<128x128xf32>, vector<16x128xf32> -> vector<16x128xf32>
    %c0_4 = arith.constant 0 : index
    %c0_5 = arith.constant 0 : index
    %6 = vector.load %arg4[%c0_4, %c0_5] : memref<1x128xf32, #tpu.memory_space<vmem>>, vector<1x128xf32>
    %7 = vector.broadcast %6 : vector<1x128xf32> to vector<16x128xf32>
    %8 = arith.addf %5, %7 : vector<16x128xf32>
    %cst_6 = arith.constant 5.000000e-01 : f32
    %9 = vector.broadcast %cst_6 : f32 to vector<16x128xf32>
    %10 = arith.mulf %9, %8 : vector<16x128xf32>
    %cst_7 = arith.constant 0.707106769 : f32
    %11 = vector.broadcast %cst_7 : f32 to vector<16x128xf32>
    %12 = arith.mulf %8, %11 : vector<16x128xf32>
    %13 = math.erf %12 : vector<16x128xf32>
    %cst_8 = arith.constant 1.000000e+00 : f32
    %14 = vector.broadcast %cst_8 : f32 to vector<16x128xf32>
    %15 = arith.addf %14, %13 : vector<16x128xf32>
    %16 = arith.mulf %10, %15 : vector<16x128xf32>
    %c0_9 = arith.constant 0 : index
    %c0_10 = arith.constant 0 : index
    %17 = vector.load %arg8[%c0_9, %c0_10] : memref<16x128xf32, #tpu.memory_space<vmem>>, vector<16x128xf32>
    %c0_11 = arith.constant 0 : index
    %c0_12 = arith.constant 0 : index
    %18 = vector.load %arg5[%c0_11, %c0_12] : memref<128x128xf32, #tpu.memory_space<vmem>>, vector<128x128xf32>
    %cst_13 = arith.constant dense<0.000000e+00> : vector<16x128xf32>
    %19 = tpu.matmul %16, %18, %cst_13 {dimension_numbers = #tpu.dot_dimension_numbers<[1], [0], [0], [1], [0, 0, 1, 1], [], []>} : vector<16x128xf32>, vector<128x128xf32>, vector<16x128xf32> -> vector<16x128xf32>
    %20 = arith.addf %17, %19 : vector<16x128xf32>
    %c0_14 = arith.constant 0 : index
    %c0_15 = arith.constant 0 : index
    %21 = vector.load %arg8[%c0_14, %c0_15] : memref<16x128xf32, #tpu.memory_space<vmem>>, vector<16x128xf32>
    tpu.vector_store %arg8[%c0_14, %c0_15], %20 {strides = array<i32>} : memref<16x128xf32, #tpu.memory_space<vmem>>, vector<16x128xf32>,
    %c0_i32_16 = arith.constant 0 : i32
    %22 = arith.cmpi eq, %arg1, %c0_i32_16 : i32
    %23 = arith.extui %22 : i1 to i32
    %c0_i32_17 = arith.constant 0 : i32
    %24 = arith.cmpi ne, %23, %c0_i32_17 : i32
    scf.if %24 {
      %c0_18 = arith.constant 0 : index
      %c0_19 = arith.constant 0 : index
      %25 = vector.load %arg8[%c0_18, %c0_19] : memref<16x128xf32, #tpu.memory_space<vmem>>, vector<16x128xf32>
      %c0_20 = arith.constant 0 : index
      %c0_21 = arith.constant 0 : index
      %26 = vector.load %arg6[%c0_20, %c0_21] : memref<1x128xf32, #tpu.memory_space<vmem>>, vector<1x128xf32>
      %27 = vector.broadcast %26 : vector<1x128xf32> to vector<16x128xf32>
      %28 = arith.addf %25, %27 : vector<16x128xf32>
      %c0_22 = arith.constant 0 : index
      %c0_23 = arith.constant 0 : index
      %29 = vector.load %arg7[%c0_22, %c0_23] : memref<16x128xf32, #tpu.memory_space<vmem>>, vector<16x128xf32>
      tpu.vector_store %arg7[%c0_22, %c0_23], %28 {strides = array<i32>} : memref<16x128xf32, #tpu.memory_space<vmem>>, vector<16x128xf32>,
    } else {
    }
    return
  }
  func.func @transform_0(%arg0: i32, %arg1: i32) -> (i32, i32) {
    %c0_i32 = arith.constant 0 : i32
    %c0_i32_0 = arith.constant 0 : i32
    return %arg0, %c0_i32 : i32, i32
  }
  func.func @transform_1(%arg0: i32, %arg1: i32) -> (i32, i32) {
    %c0_i32 = arith.constant 0 : i32
    %c0_i32_0 = arith.constant 0 : i32
    return %c0_i32, %arg1 : i32, i32
  }
  func.func @transform_2(%arg0: i32, %arg1: i32) -> (i32, i32) {
    %c0_i32 = arith.constant 0 : i32
    %c0_i32_0 = arith.constant 0 : i32
    return %c0_i32, %arg1 : i32, i32
  }
  func.func @transform_3(%arg0: i32, %arg1: i32) -> (i32, i32) {
    %c0_i32 = arith.constant 0 : i32
    %c0_i32_0 = arith.constant 0 : i32
    return %arg1, %c0_i32 : i32, i32
  }
  func.func @transform_4(%arg0: i32, %arg1: i32) -> (i32, i32) {
    %c0_i32 = arith.constant 0 : i32
    %c0_i32_0 = arith.constant 0 : i32
    %c0_i32_1 = arith.constant 0 : i32
    return %c0_i32, %c0_i32_0 : i32, i32
  }
  func.func @transform_5(%arg0: i32, %arg1: i32) -> (i32, i32) {
    %c0_i32 = arith.constant 0 : i32
    %c0_i32_0 = arith.constant 0 : i32
    return %arg0, %c0_i32 : i32, i32
  }
}

</mosaic_0001>

<llo_original>
// kernel: _lambda_.1
$region0: #{_lambda_.1}
  #allocation0 [shape = 'u32[]', space=smem, size = 0x4, offset = 0x4, fixed_abs, tag = 'smem constant byte address 0x4 - core index']
  #allocation1 [shape = 'u32[144,128]{1,0:T(1,128)}', space=vmem, size = 0x12000, scoped, tag = 'internal scratch']
  #allocation2 [shape = 'f32[16,128]{1,0:T(8,128)}', space=vmem, size = 0x2000, scoped, tag = 'scratch operand']
  %s0 = inlined_call_operand.vmem [shape: f32[16,128], index: 0, kind: input, shape index: {}]
  %s1 = inlined_call_operand.hbm [shape: f32[128,128], index: 1, kind: input, shape index: {}]
  %s2 = inlined_call_operand.vmem [shape: f32[1,128], index: 2, kind: input, shape index: {}]
  %s3 = inlined_call_operand.hbm [shape: f32[128,128], index: 3, kind: input, shape index: {}]
  %s4 = inlined_call_operand.vmem [shape: f32[1,128], index: 4, kind: input, shape index: {}]
  %s5 = inlined_call_operand.hbm [shape: f32[16,128], index: 5, kind: output, shape index: {}]
  %s6 = sld [smem:[#allocation0]]
  $region46: #{_lambda_.1} parent=0
    _
  %s8 = ssub.s32 1, %s6
  %s9 = scalar_select 0, %s8, %s6
  $region1: #{_lambda_.1} parent=0
    #allocation3 [shape = 'u8[65536]{0}', space=vmem, size = 0x10000, scoped, tag = 'input window, operand 1, single buffered']
    #allocation4 [shape = 's32[1]{0}', space=sflag, size = 0x4, scoped, tag = 'scoped memory for _lambda_.1']
    #allocation5 [shape = 's32[1]{0}', space=sflag, size = 0x4, scoped, tag = 'scoped memory for _lambda_.1']
    #allocation6 [shape = 'u8[65536]{0}', space=vmem, size = 0x10000, scoped, tag = 'input window, operand 3, single buffered']
    #allocation7 [shape = 's32[1]{0}', space=sflag, size = 0x4, scoped, tag = 'scoped memory for _lambda_.1']
    #allocation8 [shape = 'u8[8192]{0}', space=vmem, size = 0x2000, scoped, tag = 'output window, operand 0, single buffered']
    %10 = vsyncpa [#allocation4], 0
    %11 = vsyncpa [#allocation7], 0
    %12 = vsyncpa [#allocation5], 0
    // Predicated region
    $region2: #{_lambda_.1} parent=1 // pred_check
      _
    $region3: #{_lambda_.1} parent=1 // pred_check_branch
      %14 = sbr.rel (0) target = $region5
    $region4: #{_lambda_.1} parent=1 // pred_region
      _
    $region5: #{_lambda_.1} parent=1 // pred_fallthru
      _
    // Predicated region
    $region6: #{_lambda_.1} parent=1 // pred_check
      _
    $region7: #{_lambda_.1} parent=1 // pred_check_branch
      %16 = sbr.rel (0) target = $region9
    $region8: #{_lambda_.1} parent=1 // pred_region
      %s18 = ssub.s32 2048, 2048
      %19 = vsyncadd [#allocation4], %s18
      %s20 = sshll.u32 [#allocation3], 4
      %s21 = int_to_ptr.vmem [resolvable:$true] %s20
      %26 = dma.hbm_to_vmem [thread:$0]  %s1, 2048, %s21, [#allocation4], 128, 128, 8
    $region9: #{_lambda_.1} parent=1 // pred_fallthru
      _
    // Predicated region
    $region10: #{_lambda_.1} parent=1 // pred_check
      _
    $region11: #{_lambda_.1} parent=1 // pred_check_branch
      %28 = sbr.rel (0) target = $region13
    $region12: #{_lambda_.1} parent=1 // pred_region
      _
    $region13: #{_lambda_.1} parent=1 // pred_fallthru
      _
    // Predicated region
    $region14: #{_lambda_.1} parent=1 // pred_check
      _
    $region15: #{_lambda_.1} parent=1 // pred_check_branch
      %30 = sbr.rel (0) target = $region17
    $region16: #{_lambda_.1} parent=1 // pred_region
      %s32 = ssub.s32 2048, 2048
      %33 = vsyncadd [#allocation7], %s32
      %s34 = sshll.u32 [#allocation6], 4
      %s35 = int_to_ptr.vmem [resolvable:$true] %s34
      %40 = dma.hbm_to_vmem [thread:$0]  %s3, 2048, %s35, [#allocation7], 128, 128, 8
    $region17: #{_lambda_.1} parent=1 // pred_fallthru
      _
    // Predicated region
    $region18: #{_lambda_.1} parent=1 // pred_check
      _
    $region19: #{_lambda_.1} parent=1 // pred_check_branch
      %42 = sbr.rel (0) target = $region21
    $region20: #{_lambda_.1} parent=1 // pred_region
      _
    $region21: #{_lambda_.1} parent=1 // pred_fallthru
      _
    // Predicated region
    $region22: #{_lambda_.1} parent=1 // pred_check
      _
    $region23: #{_lambda_.1} parent=1 // pred_check_branch
      %44 = sbr.rel (0) target = $region25
    $region24: #{_lambda_.1} parent=1 // pred_region
      %45 = dma.done [#allocation4], 2048
    $region25: #{_lambda_.1} parent=1 // pred_fallthru
      _
    // Predicated region
    $region26: #{_lambda_.1} parent=1 // pred_check
      _
    $region27: #{_lambda_.1} parent=1 // pred_check_branch
      %47 = sbr.rel (0) target = $region29
    $region28: #{_lambda_.1} parent=1 // pred_region
      %48 = dma.done [#allocation7], 2048
    $region29: #{_lambda_.1} parent=1 // pred_fallthru
      _
    %p49 = scmp.eq.s32.totalorder 0, 0
    // Predicated region
    $region30: #{_lambda_.1} parent=1 // pred_check
      %p50 = pneg %p49
    $region31: #{_lambda_.1} parent=1 // pred_check_branch
      %52 = sbr.rel (%p50) target = $region33
    $region32: #{_lambda_.1} parent=1 // pred_region
      %53 = vst [vmem:[#allocation2] sm:$0xff] 0.0
      %54 = vst [vmem:[#allocation2 + $0x8] sm:$0xff] 0.0
    $region33: #{_lambda_.1} parent=1 // pred_fallthru
      _
    %v55 = vld [vmem:[%s0] sm:$0xff]
    %v56 = vld [vmem:[%s0 + $0x8] sm:$0xff]
    %v57 = vld [vmem:[#allocation3] sm:$0xff]
    %v58 = vld [vmem:[#allocation3 + $0x8] sm:$0xff]
    %v59 = vld [vmem:[#allocation3 + $0x10] sm:$0xff]
    %v60 = vld [vmem:[#allocation3 + $0x18] sm:$0xff]
    %v61 = vld [vmem:[#allocation3 + $0x20] sm:$0xff]
    %v62 = vld [vmem:[#allocation3 + $0x28] sm:$0xff]
    %v63 = vld [vmem:[#allocation3 + $0x30] sm:$0xff]
    %v64 = vld [vmem:[#allocation3 + $0x38] sm:$0xff]
    %v65 = vld [vmem:[#allocation3 + $0x40] sm:$0xff]
    %v66 = vld [vmem:[#allocation3 + $0x48] sm:$0xff]
    %v67 = vld [vmem:[#allocation3 + $0x50] sm:$0xff]
    %v68 = vld [vmem:[#allocation3 + $0x58] sm:$0xff]
    %v69 = vld [vmem:[#allocation3 + $0x60] sm:$0xff]
    %v70 = vld [vmem:[#allocation3 + $0x68] sm:$0xff]
    %v71 = vld [vmem:[#allocation3 + $0x70] sm:$0xff]
    %v72 = vld [vmem:[#allocation3 + $0x78] sm:$0xff]
    %v73 = vld [vmem:[%s2] sm:$0x1]
    %v75 = vlaneseq
    %v76 = vshrl.u32 %v75, 7
    %v77 = vsub.s32 0, %v76
    %v78 = vrot.slane %v73, %v77
    %80 = vmatprep.subr.mxu0 0.0
    %81 = vmatpush1.msra.mxu0 %v57
    %82 = vmatprep.subr.mxu0 0.0
    %83 = vmatpush1.msra.mxu0 %v58
    %84 = vmatprep.subr.mxu0 0.0
    %85 = vmatpush1.msra.mxu0 %v59
    %86 = vmatprep.subr.mxu0 0.0
    %87 = vmatpush1.msra.mxu0 %v60
    %88 = vmatprep.subr.mxu0 0.0
    %89 = vmatpush1.msra.mxu0 %v61
    %90 = vmatprep.subr.mxu0 0.0
    %91 = vmatpush1.msra.mxu0 %v62
    %92 = vmatprep.subr.mxu0 0.0
    %93 = vmatpush1.msra.mxu0 %v63
    %94 = vmatprep.subr.mxu0 0.0
    %95 = vmatpush1.msra.mxu0 %v64
    %96 = vmatprep.subr.mxu0 0.0
    %97 = vmatpush1.msra.mxu0 %v65
    %98 = vmatprep.subr.mxu0 0.0
    %99 = vmatpush1.msra.mxu0 %v66
    %100 = vmatprep.subr.mxu0 0.0
    %101 = vmatpush1.msra.mxu0 %v67
    %102 = vmatprep.subr.mxu0 0.0
    %103 = vmatpush1.msra.mxu0 %v68
    %104 = vmatprep.subr.mxu0 0.0
    %105 = vmatpush1.msra.mxu0 %v69
    %106 = vmatprep.subr.mxu0 0.0
    %107 = vmatpush1.msra.mxu0 %v70
    %108 = vmatprep.subr.mxu0 0.0
    %109 = vmatpush1.msra.mxu0 %v71
    %110 = vmatprep.subr.mxu0 0.0
    %111 = vmatpush1.msra.mxu0 %v72
    %112 = vmatprep.subr.mxu0 0.0
    %113 = vmatpush1.msra.mxu0 0.0
    %114 = vmatprep.subr.mxu0 0.0
    %115 = vmatpush1.msra.mxu0 0.0
    %116 = vmatprep.subr.mxu0 0.0
    %117 = vmatpush1.msra.mxu0 0.0
    %118 = vmatprep.subr.mxu0 0.0
    %119 = vmatpush1.msra.mxu0 0.0
    %120 = vmatprep.subr.mxu0 0.0
    %121 = vmatpush1.msra.mxu0 0.0
    %122 = vmatprep.subr.mxu0 0.0
    %123 = vmatpush1.msra.mxu0 0.0
    %124 = vmatprep.subr.mxu0 0.0
    %125 = vmatpush1.msra.mxu0 0.0
    %126 = vmatprep.subr.mxu0 0.0
    %127 = vmatpush1.msra.mxu0 0.0
    %128 = vmatprep.subr.mxu0 0.0
    %129 = vmatpush1.msra.mxu0 0.0
    %130 = vmatprep.subr.mxu0 0.0
    %131 = vmatpush1.msra.mxu0 0.0
    %132 = vmatprep.subr.mxu0 0.0
    %133 = vmatpush1.msra.mxu0 0.0
    %134 = vmatprep.subr.mxu0 0.0
    %135 = vmatpush1.msra.mxu0 0.0
    %136 = vmatprep.subr.mxu0 0.0
    %137 = vmatpush1.msra.mxu0 0.0
    %138 = vmatprep.subr.mxu0 0.0
    %139 = vmatpush1.msra.mxu0 0.0
    %140 = vmatprep.subr.mxu0 0.0
    %141 = vmatpush1.msra.mxu0 0.0
    %142 = vmatprep.subr.mxu0 0.0
    %143 = vmatpush1.msra.mxu0 0.0
    %144 = vmatprep.mubr.f32.mxu0 0.0
    %145 = vmatmul.mubr.f32.gmra.mrb[0].mxu0 %v55
    %v146 = vpop.f32.mrb[0].mxu0
    %v147 = vadd.f32 %v78, %v146
    %v148 = vpop.f32.mrb[0].mxu0
    %149 = vmatprep.mubr.f32.mxu0 0.0
    %150 = vmatmul.mubr.f32.gmra.mrb[0].mxu0 %v56
    %v151 = vpop.f32.mrb[0].mxu0
    %v152 = vadd.f32 %v78, %v151
    %v153 = vpop.f32.mrb[0].mxu0
    %154 = vdwg.mxu0
    %v155 = vmul.f32 %v147, 0.5
    %v156 = vmul.f32 %v152, 0.5
    %v157 = vmul.f32 %v147, 0.70710677
    %v158 = vmul.f32 %v152, 0.70710677
    %v159 = verf.f32.pop %v157
    %v160 = verf.f32.pop %v158
    %v161 = vadd.f32 %v159, 1.0
    %v162 = vadd.f32 %v160, 1.0
    %v163 = vmul.f32 %v155, %v161
    %v164 = vmul.f32 %v156, %v162
    %v165 = vld [vmem:[#allocation2] sm:$0xff]
    %v166 = vld [vmem:[#allocation2 + $0x8] sm:$0xff]
    %v167 = vld [vmem:[#allocation6] sm:$0xff]
    %v168 = vld [vmem:[#allocation6 + $0x8] sm:$0xff]
    %v169 = vld [vmem:[#allocation6 + $0x10] sm:$0xff]
    %v170 = vld [vmem:[#allocation6 + $0x18] sm:$0xff]
    %v171 = vld [vmem:[#allocation6 + $0x20] sm:$0xff]
    %v172 = vld [vmem:[#allocation6 + $0x28] sm:$0xff]
    %v173 = vld [vmem:[#allocation6 + $0x30] sm:$0xff]
    %v174 = vld [vmem:[#allocation6 + $0x38] sm:$0xff]
    %v175 = vld [vmem:[#allocation6 + $0x40] sm:$0xff]
    %v176 = vld [vmem:[#allocation6 + $0x48] sm:$0xff]
    %v177 = vld [vmem:[#allocation6 + $0x50] sm:$0xff]
    %v178 = vld [vmem:[#allocation6 + $0x58] sm:$0xff]
    %v179 = vld [vmem:[#allocation6 + $0x60] sm:$0xff]
    %v180 = vld [vmem:[#allocation6 + $0x68] sm:$0xff]
    %v181 = vld [vmem:[#allocation6 + $0x70] sm:$0xff]
    %v182 = vld [vmem:[#allocation6 + $0x78] sm:$0xff]
    %183 = vmatprep.subr.mxu0 0.0
    %184 = vmatpush1.msra.mxu0 %v167
    %185 = vmatprep.subr.mxu0 0.0
    %186 = vmatpush1.msra.mxu0 %v168
    %187 = vmatprep.subr.mxu0 0.0
    %188 = vmatpush1.msra.mxu0 %v169
    %189 = vmatprep.subr.mxu0 0.0
    %190 = vmatpush1.msra.mxu0 %v170
    %191 = vmatprep.subr.mxu0 0.0
    %192 = vmatpush1.msra.mxu0 %v171
    %193 = vmatprep.subr.mxu0 0.0
    %194 = vmatpush1.msra.mxu0 %v172
    %195 = vmatprep.subr.mxu0 0.0
    %196 = vmatpush1.msra.mxu0 %v173
    %197 = vmatprep.subr.mxu0 0.0
    %198 = vmatpush1.msra.mxu0 %v174
    %199 = vmatprep.subr.mxu0 0.0
    %200 = vmatpush1.msra.mxu0 %v175
    %201 = vmatprep.subr.mxu0 0.0
    %202 = vmatpush1.msra.mxu0 %v176
    %203 = vmatprep.subr.mxu0 0.0
    %204 = vmatpush1.msra.mxu0 %v177
    %205 = vmatprep.subr.mxu0 0.0
    %206 = vmatpush1.msra.mxu0 %v178
    %207 = vmatprep.subr.mxu0 0.0
    %208 = vmatpush1.msra.mxu0 %v179
    %209 = vmatprep.subr.mxu0 0.0
    %210 = vmatpush1.msra.mxu0 %v180
    %211 = vmatprep.subr.mxu0 0.0
    %212 = vmatpush1.msra.mxu0 %v181
    %213 = vmatprep.subr.mxu0 0.0
    %214 = vmatpush1.msra.mxu0 %v182
    %215 = vmatprep.subr.mxu0 0.0
    %216 = vmatpush1.msra.mxu0 0.0
    %217 = vmatprep.subr.mxu0 0.0
    %218 = vmatpush1.msra.mxu0 0.0
    %219 = vmatprep.subr.mxu0 0.0
    %220 = vmatpush1.msra.mxu0 0.0
    %221 = vmatprep.subr.mxu0 0.0
    %222 = vmatpush1.msra.mxu0 0.0
    %223 = vmatprep.subr.mxu0 0.0
    %224 = vmatpush1.msra.mxu0 0.0
    %225 = vmatprep.subr.mxu0 0.0
    %226 = vmatpush1.msra.mxu0 0.0
    %227 = vmatprep.subr.mxu0 0.0
    %228 = vmatpush1.msra.mxu0 0.0
    %229 = vmatprep.subr.mxu0 0.0
    %230 = vmatpush1.msra.mxu0 0.0
    %231 = vmatprep.subr.mxu0 0.0
    %232 = vmatpush1.msra.mxu0 0.0
    %233 = vmatprep.subr.mxu0 0.0
    %234 = vmatpush1.msra.mxu0 0.0
    %235 = vmatprep.subr.mxu0 0.0
    %236 = vmatpush1.msra.mxu0 0.0
    %237 = vmatprep.subr.mxu0 0.0
    %238 = vmatpush1.msra.mxu0 0.0
    %239 = vmatprep.subr.mxu0 0.0
    %240 = vmatpush1.msra.mxu0 0.0
    %241 = vmatprep.subr.mxu0 0.0
    %242 = vmatpush1.msra.mxu0 0.0
    %243 = vmatprep.subr.mxu0 0.0
    %244 = vmatpush1.msra.mxu0 0.0
    %245 = vmatprep.subr.mxu0 0.0
    %246 = vmatpush1.msra.mxu0 0.0
    %247 = vmatprep.mubr.f32.mxu0 0.0
    %248 = vmatmul.mubr.f32.gmra.mrb[0].mxu0 %v163
    %v249 = vpop.f32.mrb[0].mxu0
    %v250 = vadd.f32 0.0, %v249
    %v251 = vpop.f32.mrb[0].mxu0
    %252 = vmatprep.mubr.f32.mxu0 0.0
    %253 = vmatmul.mubr.f32.gmra.mrb[0].mxu0 %v164
    %v254 = vpop.f32.mrb[0].mxu0
    %v255 = vadd.f32 0.0, %v254
    %v256 = vpop.f32.mrb[0].mxu0
    %257 = vdwg.mxu0
    %v258 = vadd.f32 %v165, %v250
    %v259 = vadd.f32 %v166, %v255
    %260 = vst [vmem:[#allocation2] sm:$0xff] %v258
    %261 = vst [vmem:[#allocation2 + $0x8] sm:$0xff] %v259
    // Predicated region
    $region34: #{_lambda_.1} parent=1 // pred_check
      %p262 = pneg %p49
    $region35: #{_lambda_.1} parent=1 // pred_check_branch
      %264 = sbr.rel (%p262) target = $region37
    $region36: #{_lambda_.1} parent=1 // pred_region
      %v265 = vld [vmem:[#allocation2] sm:$0xff]
      %v266 = vld [vmem:[#allocation2 + $0x8] sm:$0xff]
      %v267 = vld [vmem:[%s4] sm:$0x1]
      %v269 = vlaneseq
      %v270 = vshrl.u32 %v269, 7
      %v271 = vsub.s32 0, %v270
      %v272 = vrot.slane %v267, %v271
      %v274 = vadd.f32 %v265, %v272
      %v275 = vadd.f32 %v266, %v272
      %276 = vst [vmem:[#allocation8] sm:$0xff] %v274
      %277 = vst [vmem:[#allocation8 + $0x8] sm:$0xff] %v275
    $region37: #{_lambda_.1} parent=1 // pred_fallthru
      _
    // Predicated region
    $region38: #{_lambda_.1} parent=1 // pred_check
      _
    $region39: #{_lambda_.1} parent=1 // pred_check_branch
      %279 = sbr.rel (0) target = $region41
    $region40: #{_lambda_.1} parent=1 // pred_region
      %s281 = ssub.s32 256, 256
      %282 = vsyncadd [#allocation5], %s281
      %s283 = sshll.u32 [#allocation8], 4
      %s284 = int_to_ptr.vmem [resolvable:$true] %s283
      %289 = dma.vmem_to_hbm [thread:$0]  %s284, 256, %s5, [#allocation5], 128, 128, 8
    $region41: #{_lambda_.1} parent=1 // pred_fallthru
      _
    // Predicated region
    $region42: #{_lambda_.1} parent=1 // pred_check
      _
    $region43: #{_lambda_.1} parent=1 // pred_check_branch
      %291 = sbr.rel (0) target = $region45
    $region44: #{_lambda_.1} parent=1 // pred_region
      %292 = dma.done [#allocation5], 256
    $region45: #{_lambda_.1} parent=1 // pred_fallthru
      _
    %293 = vsyncpa [#allocation4], 1
    %294 = vsyncpa [#allocation7], 1
    %295 = vsyncpa [#allocation5], 1

</llo_original>
